<compile_context>
chip_gen: v6e
topology: v6e:2x2x1
jax: 0.10.0
libtpu: 0.0.40
codegen_flags: <defaults>
</compile_context>

<pallas_src>
import functools

import jax
import jax.numpy as jnp
from jax import lax
from jax.experimental import pallas as pl
from jax.experimental.pallas import tpu as pltpu

# Matches C-RNN-GAN EPSILON. Note: 1e-40 is an f32 subnormal; TPU vector units
# flush denormals, so the lower clamp is effectively 0 for exactly-zero inputs
# (same behavior as the jnp reference executed on TPU, but it diverges from
# PyTorch on CPU/GPU where clamp(0, 1e-40) -> log -> ~-92.1). Kept to match the
# spec; use e.g. 1.2e-38 if PyTorch-CPU parity matters.
EPSILON_DEFAULT = 1e-40

_LANES = 128
_SUBLANES = 8
_MAX_BLOCK_ROWS = 4096   # 4096 * 128 * 4B = 2 MiB per f32 block
_NUM_CORES = 2           # v7x has 2 TCs/chip; a size-2 parallel axis is a
                         # harmless sequential loop on v5e/v6e (1 TC/chip).


def _gloss_sum_kernel(x_ref, out_ref, acc_ref, *, eps, block_rows, valid_rows,
                      n_blocks, blocks_per_core, has_oob, need_mask):
    """Accumulates sum(log(clip(x, eps, 1))) over this core's blocks."""
    c = pl.program_id(0)                  # core index (parallel axis)
    i = pl.program_id(1)                  # per-core block index (reduction axis)
    g = c * blocks_per_core + i           # global block index

    @pl.when(i == 0)
    def _init():
        acc_ref[...] = jnp.zeros_like(acc_ref)

    def _accumulate(mask_rows):
        x = x_ref[...].astype(jnp.float32)
        x = jnp.clip(x, jnp.float32(eps), jnp.float32(1.0))
        val = jnp.log(x)  # EUP transcendental; negation hoisted to the wrapper
        if mask_rows:
            # Only the globally-last block can run past the end of the array;
            # zero the contribution of its out-of-bounds (garbage) rows.
            row_ids = (lax.broadcasted_iota(jnp.int32, val.shape, 0)
                       + g * block_rows)
            val = jnp.where(row_ids < valid_rows, val, jnp.float32(0.0))
        # Fold into a single vreg-sized accumulator: reduction along the major
        # (non-lane/non-sublane) axis lowers to pure VALU vreg adds (no XLU).
        acc_ref[...] += val.reshape(-1, _SUBLANES, _LANES).sum(axis=0)

    if need_mask:
        # Ragged last block: mask only on that step; plain accumulate elsewhere.
        @pl.when(g < n_blocks - 1)
        def _():
            _accumulate(False)

        @pl.when(g == n_blocks - 1)
        def _():
            _accumulate(True)
        # g > n_blocks - 1 (clamped duplicate when has_oob): contributes nothing.
    elif has_oob:
        @pl.when(g < n_blocks)
        def _():
            _accumulate(False)
    else:
        _accumulate(False)

    @pl.when(i == pl.num_programs(1) - 1)
    def _finalize():
        out_ref[...] = acc_ref[...]       # per-core (8,128) partial sum


def gloss(logits_gen: jax.Array,
          eps: float = EPSILON_DEFAULT,
          max_block_rows: int = _MAX_BLOCK_ROWS) -> jax.Array:
    """Pallas implementation of GLoss.forward. Returns a scalar float32."""
    eps = float(eps)
    n_elems = logits_gen.size
    flat = jnp.ravel(logits_gen)          # keep native dtype; cast in-kernel

    tile_elems = _SUBLANES * _LANES       # 1024
    prefix_elems = (n_elems // tile_elems) * tile_elems

    tail_log = jnp.float32(0.0)
    if prefix_elems == 0:
        # Input smaller than one (8,128) tile: pad it (a <1024-element copy)
        # with 1.0, which contributes log(1) = 0.
        pad = tile_elems - n_elems
        x_kernel = jnp.concatenate([flat, jnp.ones((pad,), flat.dtype)])
    else:
        # Kernel consumes the contiguous multiple-of-1024 prefix; the <1024
        # element remainder is reduced with plain jnp (avoids the O(N)
        # concatenate-pad copy of the whole input).
        x_kernel = flat[:prefix_elems]
        if prefix_elems < n_elems:
            tail = flat[prefix_elems:].astype(jnp.float32)
            tail_log = jnp.sum(jnp.log(jnp.clip(tail, eps, 1.0)))

    rows = x_kernel.size // _LANES        # multiple of 8
    x2d = x_kernel.reshape(rows, _LANES)

    block_rows = min(int(max_block_rows), rows)
    block_rows = max(_SUBLANES, (block_rows // _SUBLANES) * _SUBLANES)
    n_blocks = pl.cdiv(rows, block_rows)
    need_mask = (rows % block_rows) != 0

    num_cores = _NUM_CORES if n_blocks >= 2 else 1
    blocks_per_core = pl.cdiv(n_blocks, num_cores)
    has_oob = (num_cores * blocks_per_core) != n_blocks

    def in_index_map(c, i):
        g = c * blocks_per_core + i
        if has_oob:
            # Clamp the duplicate trailing block to a valid index; its
            # contribution is skipped inside the kernel.
            g = jnp.minimum(g, n_blocks - 1)
        return (g, 0)

    kernel = functools.partial(
        _gloss_sum_kernel,
        eps=eps,
        block_rows=block_rows,
        valid_rows=rows,
        n_blocks=n_blocks,
        blocks_per_core=blocks_per_core,
        has_oob=has_oob,
        need_mask=need_mask,
    )

    n_kernel = rows * _LANES
    partials = pl.pallas_call(
        kernel,
        out_shape=jax.ShapeDtypeStruct((num_cores, _SUBLANES, _LANES),
                                       jnp.float32),
        grid_spec=pltpu.PrefetchScalarGridSpec(
            num_scalar_prefetch=0,
            grid=(num_cores, blocks_per_core),
            in_specs=[pl.BlockSpec((block_rows, _LANES), in_index_map)],
            out_specs=pl.BlockSpec((None, _SUBLANES, _LANES),
                                   lambda c, i: (c, 0, 0)),
            scratch_shapes=[pltpu.VMEM((_SUBLANES, _LANES), jnp.float32)],
        ),
        compiler_params=pltpu.CompilerParams(
            dimension_semantics=("parallel", "arbitrary"),
        ),
        cost_estimate=pl.CostEstimate(
            flops=5 * n_kernel,
            transcendentals=n_kernel,
            bytes_accessed=n_kernel * x2d.dtype.itemsize,
        ),
    )(x2d)

    total_log = jnp.sum(partials) + tail_log
    return -total_log / jnp.float32(n_elems)


def gloss_ref(logits_gen: jax.Array, eps: float = EPSILON_DEFAULT) -> jax.Array:
    x = jnp.clip(logits_gen.astype(jnp.float32), eps, 1.0)
    return jnp.mean(-jnp.log(x))


if __name__ == "__main__":
    key = jax.random.PRNGKey(0)
    k1, k2, k3 = jax.random.split(key, 3)

    # Small shapes consistent with a C-RNN-GAN discriminator-on-generated
    # output (probabilities in (0, 1)): batch=2, seq=8, feat=16.
    x1 = jax.random.uniform(k1, (2, 8, 16), dtype=jnp.float32)    # tiny: pad path
    x2 = jax.random.uniform(k2, (4, 32, 100), dtype=jnp.float32)  # prefix + jnp tail
    x3 = jax.random.uniform(k3, (40, 128), dtype=jnp.float32)     # multi-block grid

    out1 = jax.block_until_ready(jax.jit(gloss)(x1))
    out2 = jax.block_until_ready(jax.jit(gloss)(x2))
    # Force a small block size so the ragged-last-block + odd-block-count
    # (clamped duplicate) paths are exercised at a small shape.
    out3 = jax.block_until_ready(
        jax.jit(functools.partial(gloss, max_block_rows=16))(x3))

    for out, x in ((out1, x1), (out2, x2), (out3, x3)):
        ref = gloss_ref(x)
        assert jnp.allclose(out, ref, rtol=1e-5, atol=1e-5), (out, ref)
    print("KERNEL_OK")
</pallas_src>

<mosaic_0001>
module attributes {stable_mosaic.version = 11 : i64} {
  func.func @_gloss_sum_kernel(%arg0: i32, %arg1: i32, %arg2: memref<8x128xf32, #tpu.memory_space<vmem>>, %arg3: memref<1x8x128xf32, #tpu.memory_space<vmem>>, %arg4: memref<8x128xf32, #tpu.memory_space<vmem>>) attributes {dimension_semantics = [#tpu.dimension_semantics<parallel>, #tpu.dimension_semantics<arbitrary>], iteration_bounds = array<i64: 1, 1>, scalar_prefetch = 0 : i64, scratch_operands = 1 : i64, tpu.core_type = #tpu.core_type<tc>, window_params = [{transform_indices = @transform_0, window_bounds = array<i64: 8, 128>}, {transform_indices = @transform_1, window_bounds = array<i64: 1, 8, 128>}]} {
    %c0_i32 = arith.constant 0 : i32
    %0 = arith.cmpi eq, %arg1, %c0_i32 : i32
    %1 = arith.extui %0 : i1 to i32
    %c0_i32_0 = arith.constant 0 : i32
    %2 = arith.cmpi ne, %1, %c0_i32_0 : i32
    scf.if %2 {
      %cst_10 = arith.constant 0.000000e+00 : f32
      %17 = vector.broadcast %cst_10 : f32 to vector<8x128xf32>
      %c0_11 = arith.constant 0 : index
      %c0_12 = arith.constant 0 : index
      %18 = vector.load %arg4[%c0_11, %c0_12] : memref<8x128xf32, #tpu.memory_space<vmem>>, vector<8x128xf32>
      tpu.vector_store %arg4[%c0_11, %c0_12], %17 {strides = array<i32>} : memref<8x128xf32, #tpu.memory_space<vmem>>, vector<8x128xf32>,
    } else {
    }
    %c0 = arith.constant 0 : index
    %c0_1 = arith.constant 0 : index
    %3 = vector.load %arg2[%c0, %c0_1] : memref<8x128xf32, #tpu.memory_space<vmem>>, vector<8x128xf32>
    %cst = arith.constant 9.999940e-41 : f32
    %cst_2 = arith.constant 1.000000e+00 : f32
    %4 = vector.broadcast %cst : f32 to vector<8x128xf32>
    %5 = arith.maximumf %4, %3 : vector<8x128xf32>
    %6 = vector.broadcast %cst_2 : f32 to vector<8x128xf32>
    %7 = arith.minimumf %6, %5 : vector<8x128xf32>
    %8 = math.log %7 : vector<8x128xf32>
    %c0_3 = arith.constant 0 : index
    %c0_4 = arith.constant 0 : index
    %9 = vector.load %arg4[%c0_3, %c0_4] : memref<8x128xf32, #tpu.memory_space<vmem>>, vector<8x128xf32>
    %10 = vector.shape_cast %8 : vector<8x128xf32> to vector<1x8x128xf32>
    %cst_5 = arith.constant dense<0.000000e+00> : vector<8x128xf32>
    %11 = vector.multi_reduction <add>, %10, %cst_5 [0] : vector<1x8x128xf32> to vector<8x128xf32>
    %12 = arith.addf %9, %11 : vector<8x128xf32>
    %c0_6 = arith.constant 0 : index
    %c0_7 = arith.constant 0 : index
    %13 = vector.load %arg4[%c0_6, %c0_7] : memref<8x128xf32, #tpu.memory_space<vmem>>, vector<8x128xf32>
    tpu.vector_store %arg4[%c0_6, %c0_7], %12 {strides = array<i32>} : memref<8x128xf32, #tpu.memory_space<vmem>>, vector<8x128xf32>,
    %c0_i32_8 = arith.constant 0 : i32
    %14 = arith.cmpi eq, %arg1, %c0_i32_8 : i32
    %15 = arith.extui %14 : i1 to i32
    %c0_i32_9 = arith.constant 0 : i32
    %16 = arith.cmpi ne, %15, %c0_i32_9 : i32
    scf.if %16 {
      %c0_10 = arith.constant 0 : index
      %c0_11 = arith.constant 0 : index
      %17 = vector.load %arg4[%c0_10, %c0_11] : memref<8x128xf32, #tpu.memory_space<vmem>>, vector<8x128xf32>
      %c0_12 = arith.constant 0 : index
      %c0_13 = arith.constant 0 : index
      %c0_14 = arith.constant 0 : index
      %18 = vector.load %arg3[%c0_12, %c0_13, %c0_14] : memref<1x8x128xf32, #tpu.memory_space<vmem>>, vector<1x8x128xf32>
      %19 = vector.shape_cast %18 : vector<1x8x128xf32> to vector<8x128xf32>
      %20 = vector.shape_cast %17 : vector<8x128xf32> to vector<1x8x128xf32>
      tpu.vector_store %arg3[%c0_12, %c0_13, %c0_14], %20 {strides = array<i32>} : memref<1x8x128xf32, #tpu.memory_space<vmem>>, vector<1x8x128xf32>,
    } else {
    }
    return
  }
  func.func @transform_0(%arg0: i32, %arg1: i32) -> (i32, i32) {
    %c1_i32 = arith.constant 1 : i32
    %0 = arith.muli %arg0, %c1_i32 : i32
    %1 = arith.addi %0, %arg1 : i32
    %c0_i32 = arith.constant 0 : i32
    %c0_i32_0 = arith.constant 0 : i32
    return %1, %c0_i32 : i32, i32
  }
  func.func @transform_1(%arg0: i32, %arg1: i32) -> (i32, i32, i32) {
    %c0_i32 = arith.constant 0 : i32
    %c0_i32_0 = arith.constant 0 : i32
    %c0_i32_1 = arith.constant 0 : i32
    return %arg0, %c0_i32, %c0_i32_0 : i32, i32, i32
  }
}

</mosaic_0001>

<llo_original>
// kernel: gloss.1
$region0: #{gloss.1}
  #allocation0 [shape = 'u32[]', space=smem, size = 0x4, offset = 0x4, fixed_abs, tag = 'smem constant byte address 0x4 - core index']
  #allocation1 [shape = 'u32[144,128]{1,0:T(1,128)}', space=vmem, size = 0x12000, scoped, tag = 'internal scratch']
  #allocation2 [shape = 'f32[8,128]{1,0:T(8,128)}', space=vmem, size = 0x1000, scoped, tag = 'scratch operand']
  %s0 = inlined_call_operand.vmem [shape: f32[8,128], index: 0, kind: input, shape index: {}]
  %s1 = inlined_call_operand.vmem [shape: f32[1,8,128], index: 1, kind: output, shape index: {}]
  %s2 = sld [smem:[#allocation0]]
  $region22: #{gloss.1} parent=0
    _
  %s4 = ssub.s32 1, %s2
  %s5 = scalar_select 0, %s4, %s2
  // Predicated region
  $region2: #{gloss.1} parent=0 // pred_check
    _
  $region3: #{gloss.1} parent=0 // pred_check_branch
    %7 = sbr.rel (0) target = $region5
  $region4: #{gloss.1} parent=0 // pred_region
    %s8 = sadd.s32 0, 0
    %p9 = scmp.lt.s32.totalorder %s8, 0
    %s10 = scalar_select %p9, %s8, 0
    %s11 = smul.addr %s10, 8
    %s12 = scalar_lea.vmem %s0, %s11
    %s13 = sadd.s32 0, 0
  $region5: #{gloss.1} parent=0 // pred_fallthru
    _
  %s14 = sadd.s32 0, 0
  %p15 = scmp.lt.s32.totalorder %s14, 0
  %s16 = scalar_select %p15, %s14, 0
  %s17 = smul.addr %s16, 8
  %s18 = scalar_lea.vmem %s0, %s17
  %s19 = sadd.s32 0, 0
  %p20 = scmp.lt.s32.totalorder %s19, 0
  %s21 = scalar_select %p20, %s19, 0
  %s22 = smul.addr %s21, 8
  %s23 = scalar_lea.vmem %s0, %s22
  %s24 = sadd.s32 0, 0
  %p25 = scmp.eq.s32.totalorder 0, 0
  // Predicated region
  $region6: #{gloss.1} parent=0 // pred_check
    %p26 = pneg %p25
  $region7: #{gloss.1} parent=0 // pred_check_branch
    %28 = sbr.rel (%p26) target = $region9
  $region8: #{gloss.1} parent=0 // pred_region
    %29 = vst [vmem:[#allocation2] sm:$0xff] 0.0
  $region9: #{gloss.1} parent=0 // pred_fallthru
    _
  %v30 = vld [vmem:[%s23] sm:$0xff]
  %v31 = vmax.f32 %v30, 1e-40
  %v32 = vmin.f32 %v31, 1.0
  %v33 = vlog2.pop %v32
  %v34 = vmul.f32 %v33, 0.6931472
  %v35 = vld [vmem:[#allocation2] sm:$0xff]
  %v36 = vadd.f32 %v34, 0.0
  %v37 = vadd.f32 %v35, %v36
  %38 = vst [vmem:[#allocation2] sm:$0xff] %v37
  // Predicated region
  $region10: #{gloss.1} parent=0 // pred_check
    %p39 = pneg %p25
  $region11: #{gloss.1} parent=0 // pred_check_branch
    %41 = sbr.rel (%p39) target = $region13
  $region12: #{gloss.1} parent=0 // pred_region
    %v42 = vld [vmem:[#allocation2] sm:$0xff]
    %43 = vst [vmem:[%s1] sm:$0xff] %v42
  $region13: #{gloss.1} parent=0 // pred_fallthru
    _
  // Predicated region
  $region14: #{gloss.1} parent=0 // pred_check
    _
  $region15: #{gloss.1} parent=0 // pred_check_branch
    %45 = sbr.rel (0) target = $region17
  $region16: #{gloss.1} parent=0 // pred_region
    _
  $region17: #{gloss.1} parent=0 // pred_fallthru
    _
  // Predicated region
  $region18: #{gloss.1} parent=0 // pred_check
    _
  $region19: #{gloss.1} parent=0 // pred_check_branch
    %47 = sbr.rel (0) target = $region21
  $region20: #{gloss.1} parent=0 // pred_region
    _
  $region21: #{gloss.1} parent=0 // pred_fallthru
    _

</llo_original>
